<compile_context>
chip_gen: v5e
topology: v5e:2x2
jax: 0.10.0
libtpu: 0.0.40
codegen_flags: <defaults>
</compile_context>

<pallas_src>
import numpy as np
import jax
import jax.numpy as jnp
from jax.experimental import pallas as pl
from jax.experimental.pallas import tpu as pltpu


def emo_loss_kernel(pred_ref, gt_ref, loss_ref, cnt_ref):
    pred = pred_ref[...]                       # (N, TB)  batch-minor
    g = gt_ref[...]                            # (3, P, E, TB)
    val = g[0]                                 # (P, E, TB) target values
    idx = g[1]                                 # (P, E, TB) indices into pred
    flag = g[2]                                # (P, E, TB) valid flags
    N = pred.shape[0]

    # skip a whole person if any of its target values is NaN
    person_nan = jnp.any(jnp.isnan(val), axis=1, keepdims=True)   # (P, 1, TB)
    valid = (flag > 0.0) & jnp.logical_not(person_nan)            # (P, E, TB)

    # data-dependent gather pred[idx]: static unrolled loop over N with
    # compare + select against the (TB,) lane vector pred[n] (free sublane
    # broadcast). No (P, E, TB, N) intermediate, no cross-lane reduce.
    idx_i = idx.astype(jnp.int32)
    gathered = jnp.zeros_like(val)
    for n in range(N):
        gathered = jnp.where(idx_i == n, pred[n], gathered)

    diff = gathered - val
    sq = jnp.where(valid, diff * diff, 0.0)    # also masks NaN persons
    valid_f = valid.astype(jnp.float32)

    cnt = jnp.sum(valid_f, axis=(0, 1))                           # (TB,)
    total = jnp.sum(sq, axis=(0, 1))                              # (TB,)
    loss = total / jnp.maximum(cnt, 1.0)                          # MSE mean

    # lane-dense, unmasked (1, TB) stores
    loss_ref[...] = loss.reshape(1, -1)
    cnt_ref[...] = cnt.reshape(1, -1)


def emo_loss_pallas(pred, gt, tb=None):
    """pred: (B, N) f32, gt: (B, P, E, 3) f32.

    Returns (per_image_loss (B,), per_image_valid_mask (B,) bool).
    The 'torch.stack(tot_loss)' of the PyTorch forward is per_image_loss[mask].
    """
    B, N = pred.shape
    _, P, E, _ = gt.shape

    if tb is None:
        # >=128 lanes per step, amortize per-step overhead, but keep >=2 grid
        # tiles when B is large enough (v7x has 2 TensorCores).
        tb = max(128, min(512, 128 * pl.cdiv(B, 256)))
    TB = tb
    num_tiles = pl.cdiv(B, TB)
    B_pad = num_tiles * TB

    # Batch-minor layouts + single fused zero-pad (padded columns have
    # flag == 0, so they contribute nothing and yield mask=False).
    pred_t = jnp.transpose(pred.astype(jnp.float32))               # (N, B)
    gt_t = jnp.transpose(gt.astype(jnp.float32), (3, 1, 2, 0))     # (3, P, E, B)
    if B_pad != B:
        pad = B_pad - B
        pred_t = jnp.pad(pred_t, ((0, 0), (0, pad)))
        gt_t = jnp.pad(gt_t, ((0, 0), (0, 0), (0, 0), (0, pad)))

    loss_o, cnt_o = pl.pallas_call(
        emo_loss_kernel,
        out_shape=(jax.ShapeDtypeStruct((1, B_pad), jnp.float32),
                   jax.ShapeDtypeStruct((1, B_pad), jnp.float32)),
        grid_spec=pltpu.PrefetchScalarGridSpec(
            num_scalar_prefetch=0,
            grid=(num_tiles,),
            in_specs=[
                pl.BlockSpec((N, TB), lambda i: (0, i)),
                pl.BlockSpec((3, P, E, TB), lambda i: (0, 0, 0, i)),
            ],
            out_specs=[
                pl.BlockSpec((1, TB), lambda i: (0, i)),
                pl.BlockSpec((1, TB), lambda i: (0, i)),
            ],
        ),
        compiler_params=pltpu.CompilerParams(
            dimension_semantics=("parallel",)),
    )(pred_t, gt_t)

    per_img_loss = loss_o[0, :B]
    per_img_cnt = cnt_o[0, :B]
    mask = per_img_cnt > 0.0
    return per_img_loss, mask


def _reference(pred, gt):
    """Pure numpy reference mirroring EmoLoss(MSELoss()) semantics."""
    pred = np.asarray(pred, np.float32)
    gt = np.asarray(gt, np.float32)
    B = pred.shape[0]
    losses, masks = [], []
    for i in range(B):
        sq_sum, cnt = 0.0, 0
        for p in range(gt.shape[1]):
            person = gt[i, p]
            if np.any(np.isnan(person[:, 0])):
                continue
            for e in range(gt.shape[2]):
                if person[e, 2] > 0:
                    d = pred[i, int(person[e, 1])] - person[e, 0]
                    sq_sum += d * d
                    cnt += 1
        if cnt > 0:
            losses.append(sq_sum / cnt)
            masks.append(True)
        else:
            losses.append(0.0)
            masks.append(False)
    return np.array(losses, np.float32), np.array(masks)


if __name__ == "__main__":
    key = jax.random.PRNGKey(0)
    B, N = 2, 16          # batch, number of prediction slots per image
    P, E = 3, 8           # people per image, emotion entries per person

    k1, k2, k3 = jax.random.split(key, 3)
    pred = jax.random.normal(k1, (B, N), dtype=jnp.float32)

    gt_val = jax.random.uniform(k2, (B, P, E), dtype=jnp.float32)
    gt_idx = jax.random.randint(k3, (B, P, E), 0, N).astype(jnp.float32)
    gt_flag = jnp.ones((B, P, E), dtype=jnp.float32)

    # image 0: person 2 has NaN targets -> that person is skipped
    gt_val = gt_val.at[0, 2, :].set(jnp.nan)
    # image 1: person 1 has all flags == 0 -> that person contributes nothing
    gt_flag = gt_flag.at[1, 1, :].set(0.0)

    gt = jnp.stack([gt_val, gt_idx, gt_flag], axis=-1)   # (B, P, E, 3)

    per_img_loss, mask = emo_loss_pallas(pred, gt)
    per_img_loss = jax.block_until_ready(per_img_loss)
    mask = jax.block_until_ready(mask)

    # "torch.stack(tot_loss)" equivalent: losses of images that produced one
    stacked = np.asarray(per_img_loss)[np.asarray(mask)]

    ref_loss, ref_mask = _reference(pred, gt)
    assert np.array_equal(np.asarray(mask), ref_mask)
    assert np.allclose(np.asarray(per_img_loss)[ref_mask],
                       ref_loss[ref_mask], rtol=1e-5, atol=1e-6)
    assert np.all(np.isfinite(stacked))

    print("KERNEL_OK")
</pallas_src>

<mosaic_0001>
module attributes {stable_mosaic.version = 11 : i64} {
  func.func @emo_loss_kernel(%arg0: i32, %arg1: memref<16x128xf32, #tpu.memory_space<vmem>>, %arg2: memref<3x3x8x128xf32, #tpu.memory_space<vmem>>, %arg3: memref<1x128xf32, #tpu.memory_space<vmem>>, %arg4: memref<1x128xf32, #tpu.memory_space<vmem>>) attributes {dimension_semantics = [#tpu.dimension_semantics<parallel>], iteration_bounds = array<i64: 1>, scalar_prefetch = 0 : i64, scratch_operands = 0 : i64, tpu.core_type = #tpu.core_type<tc>, window_params = [{transform_indices = @transform_0, window_bounds = array<i64: 16, 128>}, {transform_indices = @transform_1, window_bounds = array<i64: 3, 3, 8, 128>}, {transform_indices = @transform_2, window_bounds = array<i64: 1, 128>}, {transform_indices = @transform_3, window_bounds = array<i64: 1, 128>}]} {
    %c0 = arith.constant 0 : index
    %c0_0 = arith.constant 0 : index
    %0 = vector.load %arg1[%c0, %c0_0] : memref<16x128xf32, #tpu.memory_space<vmem>>, vector<16x128xf32>
    %c0_1 = arith.constant 0 : index
    %c0_2 = arith.constant 0 : index
    %c0_3 = arith.constant 0 : index
    %c0_4 = arith.constant 0 : index
    %1 = vector.load %arg2[%c0_1, %c0_2, %c0_3, %c0_4] : memref<3x3x8x128xf32, #tpu.memory_space<vmem>>, vector<3x3x8x128xf32>
    %2 = vector.extract_strided_slice %1 {offsets = [0, 0, 0, 0], sizes = [1, 3, 8, 128], strides = [1, 1, 1, 1]} : vector<3x3x8x128xf32> to vector<1x3x8x128xf32>
    %3 = vector.shape_cast %2 : vector<1x3x8x128xf32> to vector<3x8x128xf32>
    %4 = vector.extract_strided_slice %1 {offsets = [1, 0, 0, 0], sizes = [1, 3, 8, 128], strides = [1, 1, 1, 1]} : vector<3x3x8x128xf32> to vector<1x3x8x128xf32>
    %5 = vector.shape_cast %4 : vector<1x3x8x128xf32> to vector<3x8x128xf32>
    %6 = vector.extract_strided_slice %1 {offsets = [2, 0, 0, 0], sizes = [1, 3, 8, 128], strides = [1, 1, 1, 1]} : vector<3x3x8x128xf32> to vector<1x3x8x128xf32>
    %7 = vector.shape_cast %6 : vector<1x3x8x128xf32> to vector<3x8x128xf32>
    %8 = arith.cmpf one, %3, %3 : vector<3x8x128xf32>
    %cst = arith.constant 1.000000e+00 : f32
    %cst_5 = arith.constant 0.000000e+00 : f32
    %9 = vector.broadcast %cst : f32 to vector<3x8x128xf32>
    %10 = vector.broadcast %cst_5 : f32 to vector<3x8x128xf32>
    %11 = arith.select %8, %9, %10 : vector<3x8x128xi1>, vector<3x8x128xf32>
    %cst_6 = arith.constant dense<0xFF800000> : vector<3x128xf32>
    %12 = vector.multi_reduction <maximumf>, %11, %cst_6 [1] : vector<3x8x128xf32> to vector<3x128xf32>
    %cst_7 = arith.constant 0.000000e+00 : f32
    %13 = vector.broadcast %cst_7 : f32 to vector<3x128xf32>
    %14 = arith.cmpf ogt, %12, %13 : vector<3x128xf32>
    %15 = vector.shape_cast %14 : vector<3x128xi1> to vector<3x1x128xi1>
    %cst_8 = arith.constant 0.000000e+00 : f32
    %16 = vector.broadcast %cst_8 : f32 to vector<3x8x128xf32>
    %17 = arith.cmpf ogt, %7, %16 : vector<3x8x128xf32>
    %cst_9 = arith.constant dense<true> : vector<3x1x128xi1>
    %18 = arith.xori %15, %cst_9 : vector<3x1x128xi1>
    %19 = vector.broadcast %18 : vector<3x1x128xi1> to vector<3x8x128xi1>
    %20 = arith.andi %17, %19 : vector<3x8x128xi1>
    %21 = arith.fptosi %5 : vector<3x8x128xf32> to vector<3x8x128xi32>
    %cst_10 = arith.constant 0.000000e+00 : f32
    %22 = vector.broadcast %cst_10 : f32 to vector<3x8x128xf32>
    %c0_i32 = arith.constant 0 : i32
    %23 = vector.broadcast %c0_i32 : i32 to vector<3x8x128xi32>
    %24 = arith.cmpi eq, %21, %23 : vector<3x8x128xi32>
    %25 = vector.extract_strided_slice %0 {offsets = [0, 0], sizes = [1, 128], strides = [1, 1]} : vector<16x128xf32> to vector<1x128xf32>
    %26 = vector.shape_cast %25 : vector<1x128xf32> to vector<128xf32>
    %27 = vector.shape_cast %26 : vector<128xf32> to vector<1x1x128xf32>
    %28 = vector.broadcast %27 : vector<1x1x128xf32> to vector<3x8x128xf32>
    %29 = arith.select %24, %28, %22 : vector<3x8x128xi1>, vector<3x8x128xf32>
    %c1_i32 = arith.constant 1 : i32
    %30 = vector.broadcast %c1_i32 : i32 to vector<3x8x128xi32>
    %31 = arith.cmpi eq, %21, %30 : vector<3x8x128xi32>
    %32 = vector.extract_strided_slice %0 {offsets = [1, 0], sizes = [1, 128], strides = [1, 1]} : vector<16x128xf32> to vector<1x128xf32>
    %33 = vector.shape_cast %32 : vector<1x128xf32> to vector<128xf32>
    %34 = vector.shape_cast %33 : vector<128xf32> to vector<1x1x128xf32>
    %35 = vector.broadcast %34 : vector<1x1x128xf32> to vector<3x8x128xf32>
    %36 = arith.select %31, %35, %29 : vector<3x8x128xi1>, vector<3x8x128xf32>
    %c2_i32 = arith.constant 2 : i32
    %37 = vector.broadcast %c2_i32 : i32 to vector<3x8x128xi32>
    %38 = arith.cmpi eq, %21, %37 : vector<3x8x128xi32>
    %39 = vector.extract_strided_slice %0 {offsets = [2, 0], sizes = [1, 128], strides = [1, 1]} : vector<16x128xf32> to vector<1x128xf32>
    %40 = vector.shape_cast %39 : vector<1x128xf32> to vector<128xf32>
    %41 = vector.shape_cast %40 : vector<128xf32> to vector<1x1x128xf32>
    %42 = vector.broadcast %41 : vector<1x1x128xf32> to vector<3x8x128xf32>
    %43 = arith.select %38, %42, %36 : vector<3x8x128xi1>, vector<3x8x128xf32>
    %c3_i32 = arith.constant 3 : i32
    %44 = vector.broadcast %c3_i32 : i32 to vector<3x8x128xi32>
    %45 = arith.cmpi eq, %21, %44 : vector<3x8x128xi32>
    %46 = vector.extract_strided_slice %0 {offsets = [3, 0], sizes = [1, 128], strides = [1, 1]} : vector<16x128xf32> to vector<1x128xf32>
    %47 = vector.shape_cast %46 : vector<1x128xf32> to vector<128xf32>
    %48 = vector.shape_cast %47 : vector<128xf32> to vector<1x1x128xf32>
    %49 = vector.broadcast %48 : vector<1x1x128xf32> to vector<3x8x128xf32>
    %50 = arith.select %45, %49, %43 : vector<3x8x128xi1>, vector<3x8x128xf32>
    %c4_i32 = arith.constant 4 : i32
    %51 = vector.broadcast %c4_i32 : i32 to vector<3x8x128xi32>
    %52 = arith.cmpi eq, %21, %51 : vector<3x8x128xi32>
    %53 = vector.extract_strided_slice %0 {offsets = [4, 0], sizes = [1, 128], strides = [1, 1]} : vector<16x128xf32> to vector<1x128xf32>
    %54 = vector.shape_cast %53 : vector<1x128xf32> to vector<128xf32>
    %55 = vector.shape_cast %54 : vector<128xf32> to vector<1x1x128xf32>
    %56 = vector.broadcast %55 : vector<1x1x128xf32> to vector<3x8x128xf32>
    %57 = arith.select %52, %56, %50 : vector<3x8x128xi1>, vector<3x8x128xf32>
    %c5_i32 = arith.constant 5 : i32
    %58 = vector.broadcast %c5_i32 : i32 to vector<3x8x128xi32>
    %59 = arith.cmpi eq, %21, %58 : vector<3x8x128xi32>
    %60 = vector.extract_strided_slice %0 {offsets = [5, 0], sizes = [1, 128], strides = [1, 1]} : vector<16x128xf32> to vector<1x128xf32>
    %61 = vector.shape_cast %60 : vector<1x128xf32> to vector<128xf32>
    %62 = vector.shape_cast %61 : vector<128xf32> to vector<1x1x128xf32>
    %63 = vector.broadcast %62 : vector<1x1x128xf32> to vector<3x8x128xf32>
    %64 = arith.select %59, %63, %57 : vector<3x8x128xi1>, vector<3x8x128xf32>
    %c6_i32 = arith.constant 6 : i32
    %65 = vector.broadcast %c6_i32 : i32 to vector<3x8x128xi32>
    %66 = arith.cmpi eq, %21, %65 : vector<3x8x128xi32>
    %67 = vector.extract_strided_slice %0 {offsets = [6, 0], sizes = [1, 128], strides = [1, 1]} : vector<16x128xf32> to vector<1x128xf32>
    %68 = vector.shape_cast %67 : vector<1x128xf32> to vector<128xf32>
    %69 = vector.shape_cast %68 : vector<128xf32> to vector<1x1x128xf32>
    %70 = vector.broadcast %69 : vector<1x1x128xf32> to vector<3x8x128xf32>
    %71 = arith.select %66, %70, %64 : vector<3x8x128xi1>, vector<3x8x128xf32>
    %c7_i32 = arith.constant 7 : i32
    %72 = vector.broadcast %c7_i32 : i32 to vector<3x8x128xi32>
    %73 = arith.cmpi eq, %21, %72 : vector<3x8x128xi32>
    %74 = vector.extract_strided_slice %0 {offsets = [7, 0], sizes = [1, 128], strides = [1, 1]} : vector<16x128xf32> to vector<1x128xf32>
    %75 = vector.shape_cast %74 : vector<1x128xf32> to vector<128xf32>
    %76 = vector.shape_cast %75 : vector<128xf32> to vector<1x1x128xf32>
    %77 = vector.broadcast %76 : vector<1x1x128xf32> to vector<3x8x128xf32>
    %78 = arith.select %73, %77, %71 : vector<3x8x128xi1>, vector<3x8x128xf32>
    %c8_i32 = arith.constant 8 : i32
    %79 = vector.broadcast %c8_i32 : i32 to vector<3x8x128xi32>
    %80 = arith.cmpi eq, %21, %79 : vector<3x8x128xi32>
    %81 = vector.extract_strided_slice %0 {offsets = [8, 0], sizes = [1, 128], strides = [1, 1]} : vector<16x128xf32> to vector<1x128xf32>
    %82 = vector.shape_cast %81 : vector<1x128xf32> to vector<128xf32>
    %83 = vector.shape_cast %82 : vector<128xf32> to vector<1x1x128xf32>
    %84 = vector.broadcast %83 : vector<1x1x128xf32> to vector<3x8x128xf32>
    %85 = arith.select %80, %84, %78 : vector<3x8x128xi1>, vector<3x8x128xf32>
    %c9_i32 = arith.constant 9 : i32
    %86 = vector.broadcast %c9_i32 : i32 to vector<3x8x128xi32>
    %87 = arith.cmpi eq, %21, %86 : vector<3x8x128xi32>
    %88 = vector.extract_strided_slice %0 {offsets = [9, 0], sizes = [1, 128], strides = [1, 1]} : vector<16x128xf32> to vector<1x128xf32>
    %89 = vector.shape_cast %88 : vector<1x128xf32> to vector<128xf32>
    %90 = vector.shape_cast %89 : vector<128xf32> to vector<1x1x128xf32>
    %91 = vector.broadcast %90 : vector<1x1x128xf32> to vector<3x8x128xf32>
    %92 = arith.select %87, %91, %85 : vector<3x8x128xi1>, vector<3x8x128xf32>
    %c10_i32 = arith.constant 10 : i32
    %93 = vector.broadcast %c10_i32 : i32 to vector<3x8x128xi32>
    %94 = arith.cmpi eq, %21, %93 : vector<3x8x128xi32>
    %95 = vector.extract_strided_slice %0 {offsets = [10, 0], sizes = [1, 128], strides = [1, 1]} : vector<16x128xf32> to vector<1x128xf32>
    %96 = vector.shape_cast %95 : vector<1x128xf32> to vector<128xf32>
    %97 = vector.shape_cast %96 : vector<128xf32> to vector<1x1x128xf32>
    %98 = vector.broadcast %97 : vector<1x1x128xf32> to vector<3x8x128xf32>
    %99 = arith.select %94, %98, %92 : vector<3x8x128xi1>, vector<3x8x128xf32>
    %c11_i32 = arith.constant 11 : i32
    %100 = vector.broadcast %c11_i32 : i32 to vector<3x8x128xi32>
    %101 = arith.cmpi eq, %21, %100 : vector<3x8x128xi32>
    %102 = vector.extract_strided_slice %0 {offsets = [11, 0], sizes = [1, 128], strides = [1, 1]} : vector<16x128xf32> to vector<1x128xf32>
    %103 = vector.shape_cast %102 : vector<1x128xf32> to vector<128xf32>
    %104 = vector.shape_cast %103 : vector<128xf32> to vector<1x1x128xf32>
    %105 = vector.broadcast %104 : vector<1x1x128xf32> to vector<3x8x128xf32>
    %106 = arith.select %101, %105, %99 : vector<3x8x128xi1>, vector<3x8x128xf32>
    %c12_i32 = arith.constant 12 : i32
    %107 = vector.broadcast %c12_i32 : i32 to vector<3x8x128xi32>
    %108 = arith.cmpi eq, %21, %107 : vector<3x8x128xi32>
    %109 = vector.extract_strided_slice %0 {offsets = [12, 0], sizes = [1, 128], strides = [1, 1]} : vector<16x128xf32> to vector<1x128xf32>
    %110 = vector.shape_cast %109 : vector<1x128xf32> to vector<128xf32>
    %111 = vector.shape_cast %110 : vector<128xf32> to vector<1x1x128xf32>
    %112 = vector.broadcast %111 : vector<1x1x128xf32> to vector<3x8x128xf32>
    %113 = arith.select %108, %112, %106 : vector<3x8x128xi1>, vector<3x8x128xf32>
    %c13_i32 = arith.constant 13 : i32
    %114 = vector.broadcast %c13_i32 : i32 to vector<3x8x128xi32>
    %115 = arith.cmpi eq, %21, %114 : vector<3x8x128xi32>
    %116 = vector.extract_strided_slice %0 {offsets = [13, 0], sizes = [1, 128], strides = [1, 1]} : vector<16x128xf32> to vector<1x128xf32>
    %117 = vector.shape_cast %116 : vector<1x128xf32> to vector<128xf32>
    %118 = vector.shape_cast %117 : vector<128xf32> to vector<1x1x128xf32>
    %119 = vector.broadcast %118 : vector<1x1x128xf32> to vector<3x8x128xf32>
    %120 = arith.select %115, %119, %113 : vector<3x8x128xi1>, vector<3x8x128xf32>
    %c14_i32 = arith.constant 14 : i32
    %121 = vector.broadcast %c14_i32 : i32 to vector<3x8x128xi32>
    %122 = arith.cmpi eq, %21, %121 : vector<3x8x128xi32>
    %123 = vector.extract_strided_slice %0 {offsets = [14, 0], sizes = [1, 128], strides = [1, 1]} : vector<16x128xf32> to vector<1x128xf32>
    %124 = vector.shape_cast %123 : vector<1x128xf32> to vector<128xf32>
    %125 = vector.shape_cast %124 : vector<128xf32> to vector<1x1x128xf32>
    %126 = vector.broadcast %125 : vector<1x1x128xf32> to vector<3x8x128xf32>
    %127 = arith.select %122, %126, %120 : vector<3x8x128xi1>, vector<3x8x128xf32>
    %c15_i32 = arith.constant 15 : i32
    %128 = vector.broadcast %c15_i32 : i32 to vector<3x8x128xi32>
    %129 = arith.cmpi eq, %21, %128 : vector<3x8x128xi32>
    %130 = vector.extract_strided_slice %0 {offsets = [15, 0], sizes = [1, 128], strides = [1, 1]} : vector<16x128xf32> to vector<1x128xf32>
    %131 = vector.shape_cast %130 : vector<1x128xf32> to vector<128xf32>
    %132 = vector.shape_cast %131 : vector<128xf32> to vector<1x1x128xf32>
    %133 = vector.broadcast %132 : vector<1x1x128xf32> to vector<3x8x128xf32>
    %134 = arith.select %129, %133, %127 : vector<3x8x128xi1>, vector<3x8x128xf32>
    %135 = arith.subf %134, %3 : vector<3x8x128xf32>
    %136 = arith.mulf %135, %135 : vector<3x8x128xf32>
    %cst_11 = arith.constant 0.000000e+00 : f32
    %137 = vector.broadcast %cst_11 : f32 to vector<3x8x128xf32>
    %138 = arith.select %20, %136, %137 : vector<3x8x128xi1>, vector<3x8x128xf32>
    %139 = arith.extui %20 : vector<3x8x128xi1> to vector<3x8x128xi32>
    %140 = arith.sitofp %139 : vector<3x8x128xi32> to vector<3x8x128xf32>
    %cst_12 = arith.constant dense<0.000000e+00> : vector<128xf32>
    %141 = vector.multi_reduction <add>, %140, %cst_12 [0, 1] : vector<3x8x128xf32> to vector<128xf32>
    %cst_13 = arith.constant dense<0.000000e+00> : vector<128xf32>
    %142 = vector.multi_reduction <add>, %138, %cst_13 [0, 1] : vector<3x8x128xf32> to vector<128xf32>
    %cst_14 = arith.constant 1.000000e+00 : f32
    %143 = vector.broadcast %cst_14 : f32 to vector<128xf32>
    %144 = arith.maximumf %141, %143 : vector<128xf32>
    %145 = arith.divf %142, %144 : vector<128xf32>
    %146 = vector.shape_cast %145 : vector<128xf32> to vector<1x128xf32>
    %c0_15 = arith.constant 0 : index
    %c0_16 = arith.constant 0 : index
    %147 = vector.load %arg3[%c0_15, %c0_16] : memref<1x128xf32, #tpu.memory_space<vmem>>, vector<1x128xf32>
    tpu.vector_store %arg3[%c0_15, %c0_16], %146 {strides = array<i32>} : memref<1x128xf32, #tpu.memory_space<vmem>>, vector<1x128xf32>,
    %148 = vector.shape_cast %141 : vector<128xf32> to vector<1x128xf32>
    %c0_17 = arith.constant 0 : index
    %c0_18 = arith.constant 0 : index
    %149 = vector.load %arg4[%c0_17, %c0_18] : memref<1x128xf32, #tpu.memory_space<vmem>>, vector<1x128xf32>
    tpu.vector_store %arg4[%c0_17, %c0_18], %148 {strides = array<i32>} : memref<1x128xf32, #tpu.memory_space<vmem>>, vector<1x128xf32>,
    return
  }
  func.func @transform_0(%arg0: i32) -> (i32, i32) {
    %c0_i32 = arith.constant 0 : i32
    %c0_i32_0 = arith.constant 0 : i32
    return %c0_i32, %arg0 : i32, i32
  }
  func.func @transform_1(%arg0: i32) -> (i32, i32, i32, i32) {
    %c0_i32 = arith.constant 0 : i32
    %c0_i32_0 = arith.constant 0 : i32
    %c0_i32_1 = arith.constant 0 : i32
    %c0_i32_2 = arith.constant 0 : i32
    return %c0_i32, %c0_i32_0, %c0_i32_1, %arg0 : i32, i32, i32, i32
  }
  func.func @transform_2(%arg0: i32) -> (i32, i32) {
    %c0_i32 = arith.constant 0 : i32
    %c0_i32_0 = arith.constant 0 : i32
    return %c0_i32, %arg0 : i32, i32
  }
  func.func @transform_3(%arg0: i32) -> (i32, i32) {
    %c0_i32 = arith.constant 0 : i32
    %c0_i32_0 = arith.constant 0 : i32
    return %c0_i32, %arg0 : i32, i32
  }
}

</mosaic_0001>

<llo_original>
// kernel: tpu_custom_call.1
$region0: #{tpu_custom_call.1}
  #allocation0 [shape = 'u32[]', space=smem, size = 0x4, offset = 0x4, fixed_abs, tag = 'smem constant byte address 0x4 - core index']
  #allocation1 [shape = 'u32[72,128]{1,0:T(1,128)}', space=vmem, size = 0x9000, scoped, tag = 'internal scratch']
  %s0 = inlined_call_operand.hbm [shape: f32[16,128], index: 0, kind: input, shape index: {}]
  %s1 = inlined_call_operand.hbm [shape: f32[3,3,8,128], index: 1, kind: input, shape index: {}]
  %s2 = inlined_call_operand.hbm [shape: f32[1,128], index: 2, kind: output, shape index: {0}]
  %s3 = inlined_call_operand.hbm [shape: f32[1,128], index: 3, kind: output, shape index: {1}]
  %4 = xla_tuple %s2, %s3
  %s5 = sld [smem:[#allocation0]]
  $region34: #{tpu_custom_call.1} parent=0
    _
  %s7 = ssub.s32 1, %s5
  %s8 = scalar_select 0, %s7, %s5
  $region1: #{tpu_custom_call.1} parent=0
    #allocation2 [shape = 'u8[8192]{0}', space=vmem, size = 0x2000, scoped, tag = 'input window, operand 0, single buffered']
    #allocation3 [shape = 's32[1]{0}', space=sflag, size = 0x4, scoped, tag = 'scoped memory for tpu_custom_call.1']
    #allocation4 [shape = 's32[1]{0}', space=sflag, size = 0x4, scoped, tag = 'scoped memory for tpu_custom_call.1']
    #allocation5 [shape = 'u8[36864]{0}', space=vmem, size = 0x9000, scoped, tag = 'input window, operand 1, single buffered']
    #allocation6 [shape = 's32[1]{0}', space=sflag, size = 0x4, scoped, tag = 'scoped memory for tpu_custom_call.1']
    #allocation7 [shape = 'u8[512]{0}', space=vmem, size = 0x400, scoped, tag = 'output window, operand 0, single buffered']
    #allocation8 [shape = 'u8[512]{0}', space=vmem, size = 0x400, scoped, tag = 'output window, operand 1, single buffered']
    #allocation9 [shape = 's32[1]{0}', space=sflag, size = 0x4, scoped, tag = 'scoped memory for tpu_custom_call.1']
    %9 = vsyncpa [#allocation3], 0
    %10 = vsyncpa [#allocation6], 0
    %11 = vsyncpa [#allocation4], 0
    %12 = vsyncpa [#allocation9], 0
    // Predicated region
    $region2: #{tpu_custom_call.1} parent=1 // pred_check
      _
    $region3: #{tpu_custom_call.1} parent=1 // pred_check_branch
      %14 = sbr.rel (0) target = $region5
    $region4: #{tpu_custom_call.1} parent=1 // pred_region
      %16 = vsyncadd [#allocation3], 0
      %s17 = sshll.u32 %s0, 4
      %s18 = int_to_ptr.hbm [resolvable:$true] %s17
      %s19 = sshll.u32 [#allocation2], 4
      %s20 = int_to_ptr.vmem [resolvable:$true] %s19
      %25 = dma.hbm_to_vmem [thread:$0]  %s18, 256, %s20, [#allocation3], 128, 128, 8
    $region5: #{tpu_custom_call.1} parent=1 // pred_fallthru
      _
    // Predicated region
    $region6: #{tpu_custom_call.1} parent=1 // pred_check
      _
    $region7: #{tpu_custom_call.1} parent=1 // pred_check_branch
      %27 = sbr.rel (0) target = $region9
    $region8: #{tpu_custom_call.1} parent=1 // pred_region
      %29 = vsyncadd [#allocation6], 0
      %s30 = sshll.u32 %s1, 4
      %s31 = int_to_ptr.hbm [resolvable:$true] %s30
      %s32 = sshll.u32 [#allocation5], 4
      %s33 = int_to_ptr.vmem [resolvable:$true] %s32
      %38 = dma.hbm_to_vmem [thread:$0]  %s31, 1152, %s33, [#allocation6], 128, 128, 8
    $region9: #{tpu_custom_call.1} parent=1 // pred_fallthru
      _
    // Predicated region
    $region10: #{tpu_custom_call.1} parent=1 // pred_check
      _
    $region11: #{tpu_custom_call.1} parent=1 // pred_check_branch
      %40 = sbr.rel (0) target = $region13
    $region12: #{tpu_custom_call.1} parent=1 // pred_region
      %42 = dma.done [#allocation3], 256
    $region13: #{tpu_custom_call.1} parent=1 // pred_fallthru
      _
    // Predicated region
    $region14: #{tpu_custom_call.1} parent=1 // pred_check
      _
    $region15: #{tpu_custom_call.1} parent=1 // pred_check_branch
      %44 = sbr.rel (0) target = $region17
    $region16: #{tpu_custom_call.1} parent=1 // pred_region
      %46 = dma.done [#allocation6], 1152
    $region17: #{tpu_custom_call.1} parent=1 // pred_fallthru
      _
    %v47 = vld [vmem:[#allocation2] sm:$0xff]
    %v48 = vld [vmem:[#allocation2 + $0x8] sm:$0xff]
    %v49 = vld [vmem:[#allocation5] sm:$0xff]
    %v50 = vld [vmem:[#allocation5 + $0x8] sm:$0xff]
    %v51 = vld [vmem:[#allocation5 + $0x10] sm:$0xff]
    %v52 = vld [vmem:[#allocation5 + $0x18] sm:$0xff]
    %v53 = vld [vmem:[#allocation5 + $0x20] sm:$0xff]
    %v54 = vld [vmem:[#allocation5 + $0x28] sm:$0xff]
    %v55 = vld [vmem:[#allocation5 + $0x30] sm:$0xff]
    %v56 = vld [vmem:[#allocation5 + $0x38] sm:$0xff]
    %v57 = vld [vmem:[#allocation5 + $0x40] sm:$0xff]
    %vm58 = vcmp.ne.f32.partialorder %v49, %v49
    %vm59 = vcmp.ne.f32.partialorder %v50, %v50
    %vm60 = vcmp.ne.f32.partialorder %v51, %v51
    %v61 = vsel %vm58, 1.0, 0.0
    %v62 = vsel %vm59, 1.0, 0.0
    %v63 = vsel %vm60, 1.0, 0.0
    %v64 = vrot.slane %v61, 4
    %v65 = vmax.f32 %v61, %v64
    %v66 = vrot.slane %v65, 2
    %v67 = vmax.f32 %v65, %v66
    %v68 = vrot.slane %v67, 1
    %v69 = vmax.f32 %v67, %v68
    %v70 = vrot.slane %v62, 4
    %v71 = vmax.f32 %v62, %v70
    %v72 = vrot.slane %v71, 2
    %v73 = vmax.f32 %v71, %v72
    %v74 = vrot.slane %v73, 1
    %v75 = vmax.f32 %v73, %v74
    %v76 = vrot.slane %v63, 4
    %v77 = vmax.f32 %v63, %v76
    %v78 = vrot.slane %v77, 2
    %v79 = vmax.f32 %v77, %v78
    %v80 = vrot.slane %v79, 1
    %v81 = vmax.f32 %v79, %v80
    %vm82 = vcmp.gt.f32.partialorder %v69, 0.0
    %vm83 = vcmp.gt.f32.partialorder %v75, 0.0
    %vm84 = vcmp.gt.f32.partialorder %v81, 0.0
    %vm85 = vcmp.gt.f32.partialorder %v55, 0.0
    %vm86 = vcmp.gt.f32.partialorder %v56, 0.0
    %vm87 = vcmp.gt.f32.partialorder %v57, 0.0
    %vm88 = vmxor %vm82, 1
    %vm89 = vmxor %vm83, 1
    %vm90 = vmxor %vm84, 1
    %v91 = vsel %vm88, 1, 0
    %v92 = vsel %vm89, 1, 0
    %v93 = vsel %vm90, 1, 0
    %vm94 = vcmp.eq.s32.totalorder %v91, 1
    %vm95 = vcmp.eq.s32.totalorder %v92, 1
    %vm96 = vcmp.eq.s32.totalorder %v93, 1
    %vm97 = vmand %vm85, %vm94
    %vm98 = vmand %vm86, %vm95
    %vm99 = vmand %vm87, %vm96
    %v100 = vcvt.f32.s32.to.zero.pseudo %v52
    %v101 = vcvt.f32.s32.to.zero.pseudo %v53
    %v102 = vcvt.f32.s32.to.zero.pseudo %v54
    %vm103 = vcmp.eq.s32.totalorder %v100, 0
    %vm104 = vcmp.eq.s32.totalorder %v101, 0
    %vm105 = vcmp.eq.s32.totalorder %v102, 0
    %v106 = vperm.slane %v47, 0
    %v107 = vsel %vm103, %v106, 0.0
    %v108 = vsel %vm104, %v106, 0.0
    %v109 = vsel %vm105, %v106, 0.0
    %vm110 = vcmp.eq.s32.totalorder %v100, 1
    %vm111 = vcmp.eq.s32.totalorder %v101, 1
    %vm112 = vcmp.eq.s32.totalorder %v102, 1
    %v113 = vperm.slane %v47, 1
    %v114 = vsel %vm110, %v113, %v107
    %v115 = vsel %vm111, %v113, %v108
    %v116 = vsel %vm112, %v113, %v109
    %vm117 = vcmp.eq.s32.totalorder %v100, 2
    %vm118 = vcmp.eq.s32.totalorder %v101, 2
    %vm119 = vcmp.eq.s32.totalorder %v102, 2
    %v120 = vperm.slane %v47, 2
    %v121 = vsel %vm117, %v120, %v114
    %v122 = vsel %vm118, %v120, %v115
    %v123 = vsel %vm119, %v120, %v116
    %vm124 = vcmp.eq.s32.totalorder %v100, 3
    %vm125 = vcmp.eq.s32.totalorder %v101, 3
    %vm126 = vcmp.eq.s32.totalorder %v102, 3
    %v127 = vperm.slane %v47, 3
    %v128 = vsel %vm124, %v127, %v121
    %v129 = vsel %vm125, %v127, %v122
    %v130 = vsel %vm126, %v127, %v123
    %vm131 = vcmp.eq.s32.totalorder %v100, 4
    %vm132 = vcmp.eq.s32.totalorder %v101, 4
    %vm133 = vcmp.eq.s32.totalorder %v102, 4
    %v134 = vperm.slane %v47, 4
    %v135 = vsel %vm131, %v134, %v128
    %v136 = vsel %vm132, %v134, %v129
    %v137 = vsel %vm133, %v134, %v130
    %vm138 = vcmp.eq.s32.totalorder %v100, 5
    %vm139 = vcmp.eq.s32.totalorder %v101, 5
    %vm140 = vcmp.eq.s32.totalorder %v102, 5
    %v141 = vperm.slane %v47, 5
    %v142 = vsel %vm138, %v141, %v135
    %v143 = vsel %vm139, %v141, %v136
    %v144 = vsel %vm140, %v141, %v137
    %vm145 = vcmp.eq.s32.totalorder %v100, 6
    %vm146 = vcmp.eq.s32.totalorder %v101, 6
    %vm147 = vcmp.eq.s32.totalorder %v102, 6
    %v148 = vperm.slane %v47, 6
    %v149 = vsel %vm145, %v148, %v142
    %v150 = vsel %vm146, %v148, %v143
    %v151 = vsel %vm147, %v148, %v144
    %vm152 = vcmp.eq.s32.totalorder %v100, 7
    %vm153 = vcmp.eq.s32.totalorder %v101, 7
    %vm154 = vcmp.eq.s32.totalorder %v102, 7
    %v155 = vperm.slane %v47, 7
    %v156 = vsel %vm152, %v155, %v149
    %v157 = vsel %vm153, %v155, %v150
    %v158 = vsel %vm154, %v155, %v151
    %vm159 = vcmp.eq.s32.totalorder %v100, 8
    %vm160 = vcmp.eq.s32.totalorder %v101, 8
    %vm161 = vcmp.eq.s32.totalorder %v102, 8
    %v162 = vperm.slane %v48, 0
    %v163 = vsel %vm159, %v162, %v156
    %v164 = vsel %vm160, %v162, %v157
    %v165 = vsel %vm161, %v162, %v158
    %vm166 = vcmp.eq.s32.totalorder %v100, 9
    %vm167 = vcmp.eq.s32.totalorder %v101, 9
    %vm168 = vcmp.eq.s32.totalorder %v102, 9
    %v169 = vperm.slane %v48, 1
    %v170 = vsel %vm166, %v169, %v163
    %v171 = vsel %vm167, %v169, %v164
    %v172 = vsel %vm168, %v169, %v165
    %vm173 = vcmp.eq.s32.totalorder %v100, 10
    %vm174 = vcmp.eq.s32.totalorder %v101, 10
    %vm175 = vcmp.eq.s32.totalorder %v102, 10
    %v176 = vperm.slane %v48, 2
    %v177 = vsel %vm173, %v176, %v170
    %v178 = vsel %vm174, %v176, %v171
    %v179 = vsel %vm175, %v176, %v172
    %vm180 = vcmp.eq.s32.totalorder %v100, 11
    %vm181 = vcmp.eq.s32.totalorder %v101, 11
    %vm182 = vcmp.eq.s32.totalorder %v102, 11
    %v183 = vperm.slane %v48, 3
    %v184 = vsel %vm180, %v183, %v177
    %v185 = vsel %vm181, %v183, %v178
    %v186 = vsel %vm182, %v183, %v179
    %vm187 = vcmp.eq.s32.totalorder %v100, 12
    %vm188 = vcmp.eq.s32.totalorder %v101, 12
    %vm189 = vcmp.eq.s32.totalorder %v102, 12
    %v190 = vperm.slane %v48, 4
    %v191 = vsel %vm187, %v190, %v184
    %v192 = vsel %vm188, %v190, %v185
    %v193 = vsel %vm189, %v190, %v186
    %vm194 = vcmp.eq.s32.totalorder %v100, 13
    %vm195 = vcmp.eq.s32.totalorder %v101, 13
    %vm196 = vcmp.eq.s32.totalorder %v102, 13
    %v197 = vperm.slane %v48, 5
    %v198 = vsel %vm194, %v197, %v191
    %v199 = vsel %vm195, %v197, %v192
    %v200 = vsel %vm196, %v197, %v193
    %vm201 = vcmp.eq.s32.totalorder %v100, 14
    %vm202 = vcmp.eq.s32.totalorder %v101, 14
    %vm203 = vcmp.eq.s32.totalorder %v102, 14
    %v204 = vperm.slane %v48, 6
    %v205 = vsel %vm201, %v204, %v198
    %v206 = vsel %vm202, %v204, %v199
    %v207 = vsel %vm203, %v204, %v200
    %vm208 = vcmp.eq.s32.totalorder %v100, 15
    %vm209 = vcmp.eq.s32.totalorder %v101, 15
    %vm210 = vcmp.eq.s32.totalorder %v102, 15
    %v211 = vperm.slane %v48, 7
    %v212 = vsel %vm208, %v211, %v205
    %v213 = vsel %vm209, %v211, %v206
    %v214 = vsel %vm210, %v211, %v207
    %v215 = vsub.f32 %v212, %v49
    %v216 = vsub.f32 %v213, %v50
    %v217 = vsub.f32 %v214, %v51
    %v218 = vmul.f32 %v215, %v215
    %v219 = vmul.f32 %v216, %v216
    %v220 = vmul.f32 %v217, %v217
    %v221 = vsel %vm97, %v218, 0.0
    %v222 = vsel %vm98, %v219, 0.0
    %v223 = vsel %vm99, %v220, 0.0
    %v224 = vsel %vm97, 1, 0
    %v225 = vsel %vm98, 1, 0
    %v226 = vsel %vm99, 1, 0
    %v227 = vcvt.s32.f32 %v224
    %v228 = vcvt.s32.f32 %v225
    %v229 = vcvt.s32.f32 %v226
    %v230 = vadd.f32 %v227, %v228
    %v231 = vadd.f32 %v230, %v229
    %v232 = vrot.slane %v231, 4
    %v233 = vadd.f32 %v231, %v232
    %v234 = vrot.slane %v233, 2
    %v235 = vadd.f32 %v233, %v234
    %v236 = vrot.slane %v235, 1
    %v237 = vadd.f32 %v235, %v236
    %v238 = vadd.f32 %v221, %v222
    %v239 = vadd.f32 %v238, %v223
    %v240 = vrot.slane %v239, 4
    %v241 = vadd.f32 %v239, %v240
    %v242 = vrot.slane %v241, 2
    %v243 = vadd.f32 %v241, %v242
    %v244 = vrot.slane %v243, 1
    %v245 = vadd.f32 %v243, %v244
    %v246 = vmax.f32 %v237, 1.0
    %v247 = vrcp.pop %v246
    %v248 = vmul.f32 %v246, %v247
    %v249 = vsub.f32 1.0, %v248
    %v250 = vmul.f32 %v247, %v249
    %v251 = vadd.f32 %v247, %v250
    %vm252 = vweird.f32 %v246
    %vm253 = vweird.f32 %v247
    %vm254 = vmor %vm252, %vm253
    %v255 = vsel %vm254, %v247, %v251
    %v256 = vand.u32 2147483647, %v246
    %vm257 = vcmp.eq.f32.partialorder %v256, 8.507059e+37
    %v258 = vand.u32 %v246, 2147483648
    %v259 = vor.u32 1.1754944e-38, %v258
    %v260 = vsel %vm257, %v259, %v255
    %v261 = vmul.f32 %v245, %v260
    %262 = vst [vmem:[#allocation7] sm:$0x1] %v261
    %263 = vst [vmem:[#allocation8] sm:$0x1] %v237
    // Predicated region
    $region18: #{tpu_custom_call.1} parent=1 // pred_check
      _
    $region19: #{tpu_custom_call.1} parent=1 // pred_check_branch
      %265 = sbr.rel (0) target = $region21
    $region20: #{tpu_custom_call.1} parent=1 // pred_region
      %267 = vsyncadd [#allocation4], 0
      %s269 = sshll.u32 [#allocation7], 4
      %s270 = int_to_ptr.vmem [resolvable:$true] %s269
      %s271 = sshll.u32 %s2, 4
      %s272 = int_to_ptr.hbm [resolvable:$true] %s271
      %274 = dma.vmem_to_hbm [thread:$0]  %s270, 16, %s272, [#allocation4]
    $region21: #{tpu_custom_call.1} parent=1 // pred_fallthru
      _
    // Predicated region
    $region22: #{tpu_custom_call.1} parent=1 // pred_check
      _
    $region23: #{tpu_custom_call.1} parent=1 // pred_check_branch
      %276 = sbr.rel (0) target = $region25
    $region24: #{tpu_custom_call.1} parent=1 // pred_region
      %278 = vsyncadd [#allocation9], 0
      %s280 = sshll.u32 [#allocation8], 4
      %s281 = int_to_ptr.vmem [resolvable:$true] %s280
      %s282 = sshll.u32 %s3, 4
      %s283 = int_to_ptr.hbm [resolvable:$true] %s282
      %285 = dma.vmem_to_hbm [thread:$0]  %s281, 16, %s283, [#allocation9]
    $region25: #{tpu_custom_call.1} parent=1 // pred_fallthru
      _
    // Predicated region
    $region26: #{tpu_custom_call.1} parent=1 // pred_check
      _
    $region27: #{tpu_custom_call.1} parent=1 // pred_check_branch
      %287 = sbr.rel (0) target = $region29
    $region28: #{tpu_custom_call.1} parent=1 // pred_region
      %289 = dma.done [#allocation4], 16
    $region29: #{tpu_custom_call.1} parent=1 // pred_fallthru
      _
    // Predicated region
    $region30: #{tpu_custom_call.1} parent=1 // pred_check
      _
    $region31: #{tpu_custom_call.1} parent=1 // pred_check_branch
      %291 = sbr.rel (0) target = $region33
    $region32: #{tpu_custom_call.1} parent=1 // pred_region
      %293 = dma.done [#allocation9], 16
    $region33: #{tpu_custom_call.1} parent=1 // pred_fallthru
      _
    %294 = vsyncpa [#allocation3], 1
    %295 = vsyncpa [#allocation6], 1
    %296 = vsyncpa [#allocation4], 1
    %297 = vsyncpa [#allocation9], 1

</llo_original>
